<compile_context>
chip_gen: v7x
topology: tpu7x:2x2x1
jax: 0.10.0
libtpu: 0.0.40
codegen_flags: <defaults>
</compile_context>

<pallas_src>
import functools
import math

import jax
import jax.numpy as jnp
from jax import lax
from jax.experimental import pallas as pl
from jax.experimental.pallas import tpu as pltpu

VMEM_LIMIT = 64 * 1024 * 1024  # fits v7x (64 MiB physical), below v5e/v6e 128 MiB


def _round_up(x, m):
    return ((x + m - 1) // m) * m


# ----------------------------------------------------------------------------
# Tiled matmul (used by the conv-as-matmul backbone path)
# ----------------------------------------------------------------------------
def _matmul_kernel_bias(a_ref, b_ref, bias_ref, o_ref, acc_ref, *, activation):
    @pl.when(pl.program_id(2) == 0)
    def _():
        acc_ref[...] = jnp.zeros_like(acc_ref)

    acc_ref[...] += jnp.dot(a_ref[...], b_ref[...],
                            preferred_element_type=jnp.float32)

    @pl.when(pl.program_id(2) == pl.num_programs(2) - 1)
    def _():
        out = acc_ref[...] + bias_ref[...]
        if activation == "relu":
            out = jnp.maximum(out, 0.0)
        o_ref[...] = out.astype(o_ref.dtype)


def _matmul_kernel_nobias(a_ref, b_ref, o_ref, acc_ref, *, activation):
    @pl.when(pl.program_id(2) == 0)
    def _():
        acc_ref[...] = jnp.zeros_like(acc_ref)

    acc_ref[...] += jnp.dot(a_ref[...], b_ref[...],
                            preferred_element_type=jnp.float32)

    @pl.when(pl.program_id(2) == pl.num_programs(2) - 1)
    def _():
        out = acc_ref[...]
        if activation == "relu":
            out = jnp.maximum(out, 0.0)
        o_ref[...] = out.astype(o_ref.dtype)


def pallas_matmul(a, b, bias=None, activation="none",
                  tm=256, tn=256, tk=512):
    """(M,K) @ (K,N) (+bias, optional ReLU). bf16 MXU operands, f32 accumulate.

    Tiled/pipelined; M,N,K are zero-padded to tile multiples (lane-aligned)
    and the result is sliced back.
    """
    M, K = a.shape
    K2, N = b.shape
    assert K == K2
    tm = min(tm, _round_up(M, 8))
    tn = min(tn, _round_up(N, 128))
    tk = min(tk, _round_up(K, 128))
    Mp, Kp, Np = _round_up(M, tm), _round_up(K, tk), _round_up(N, tn)

    a_p = jnp.pad(a.astype(jnp.bfloat16), ((0, Mp - M), (0, Kp - K)))
    b_p = jnp.pad(b.astype(jnp.bfloat16), ((0, Kp - K), (0, Np - N)))

    in_specs = [
        pl.BlockSpec((tm, tk), lambda i, j, k: (i, k)),
        pl.BlockSpec((tk, tn), lambda i, j, k: (k, j)),
    ]
    args = [a_p, b_p]
    if bias is not None:
        bias_p = jnp.pad(bias.reshape(1, N).astype(jnp.float32),
                         ((0, 0), (0, Np - N)))
        in_specs.append(pl.BlockSpec((1, tn), lambda i, j, k: (0, j)))
        args.append(bias_p)
        kernel = functools.partial(_matmul_kernel_bias, activation=activation)
    else:
        kernel = functools.partial(_matmul_kernel_nobias, activation=activation)

    out = pl.pallas_call(
        kernel,
        out_shape=jax.ShapeDtypeStruct((Mp, Np), jnp.float32),
        grid=(Mp // tm, Np // tn, Kp // tk),
        in_specs=in_specs,
        out_specs=pl.BlockSpec((tm, tn), lambda i, j, k: (i, j)),
        scratch_shapes=[pltpu.VMEM((tm, tn), jnp.float32)],
        compiler_params=pltpu.CompilerParams(
            dimension_semantics=("parallel", "parallel", "arbitrary"),
            vmem_limit_bytes=VMEM_LIMIT),
    )(*args)
    return out[:M, :N]


# ----------------------------------------------------------------------------
# Fused LoFTR encoder layer kernel (QKV + attention + merge + LN + MLP + res)
# ----------------------------------------------------------------------------
def _layer_norm_inkernel(x, g, b, eps=1e-5):
    mu = jnp.mean(x, axis=-1, keepdims=True)
    var = jnp.mean(jnp.square(x - mu), axis=-1, keepdims=True)
    return (x - mu) * lax.rsqrt(var + eps) * g + b


def _encoder_layer_kernel(x_ref, src_ref, qw_ref, kw_ref, vw_ref, mw_ref,
                          n1g_ref, n1b_ref, w1x_ref, w1m_ref, w2_ref,
                          n2g_ref, n2b_ref, o_ref, *, nhead, scale):
    x = x_ref[0]                      # (L, C)  f32
    src = src_ref[0]                  # (Ls, C) f32
    xb = x.astype(jnp.bfloat16)
    sb = src.astype(jnp.bfloat16)

    # Per-head attention; head split/merge folded into pre-sliced weights so
    # no activation reshape/transpose happens inside the kernel.
    merged = None
    for h in range(nhead):
        q = jnp.dot(xb, qw_ref[h], preferred_element_type=jnp.float32)   # (L, dh)
        k = jnp.dot(sb, kw_ref[h], preferred_element_type=jnp.float32)   # (Ls, dh)
        v = jnp.dot(sb, vw_ref[h], preferred_element_type=jnp.float32)   # (Ls, dh)

        # scores: contract last dims (no K transpose materialization)
        s = lax.dot_general(q.astype(jnp.bfloat16), k.astype(jnp.bfloat16),
                            (((1,), (1,)), ((), ())),
                            preferred_element_type=jnp.float32) * scale  # (L, Ls)
        m = jnp.max(s, axis=-1, keepdims=True)
        p = jnp.exp(s - m)
        denom = jnp.sum(p, axis=-1, keepdims=True)
        p = p * pl.reciprocal(denom, approx=True)

        msg_h = jnp.dot(p.astype(jnp.bfloat16), v.astype(jnp.bfloat16),
                        preferred_element_type=jnp.float32)              # (L, dh)
        contrib = jnp.dot(msg_h.astype(jnp.bfloat16), mw_ref[h],
                          preferred_element_type=jnp.float32)            # (L, C)
        merged = contrib if merged is None else merged + contrib

    msg = _layer_norm_inkernel(merged, n1g_ref[...], n1b_ref[...])       # (L, C)

    # MLP on concat([x, msg]) done as two matmuls (avoids in-kernel lane concat)
    hmid = (jnp.dot(xb, w1x_ref[...], preferred_element_type=jnp.float32)
            + jnp.dot(msg.astype(jnp.bfloat16), w1m_ref[...],
                      preferred_element_type=jnp.float32))
    hmid = jnp.maximum(hmid, 0.0)                                        # (L, 2C)
    out2 = jnp.dot(hmid.astype(jnp.bfloat16), w2_ref[...],
                   preferred_element_type=jnp.float32)                   # (L, C)
    msg2 = _layer_norm_inkernel(out2, n2g_ref[...], n2b_ref[...])

    o_ref[0] = (x + msg2).astype(o_ref.dtype)


def encoder_layer_pallas(x_stack, src_stack, wp, nhead):
    """Fused encoder layer. x_stack: (B, L, C), src_stack: (B, Ls, C)."""
    B, L, C = x_stack.shape
    _, Ls, _ = src_stack.shape
    dh = C // nhead

    def _full_spec(shape):
        n = len(shape)
        return pl.BlockSpec(shape, lambda b, _n=n: (0,) * _n)

    kernel = functools.partial(_encoder_layer_kernel, nhead=nhead,
                               scale=1.0 / math.sqrt(dh))
    return pl.pallas_call(
        kernel,
        out_shape=jax.ShapeDtypeStruct((B, L, C), jnp.float32),
        grid=(B,),
        in_specs=[
            pl.BlockSpec((1, L, C), lambda b: (b, 0, 0)),
            pl.BlockSpec((1, Ls, C), lambda b: (b, 0, 0)),
            _full_spec((nhead, C, dh)),   # q_w
            _full_spec((nhead, C, dh)),   # k_w
            _full_spec((nhead, C, dh)),   # v_w
            _full_spec((nhead, dh, C)),   # merge_w
            _full_spec((1, C)), _full_spec((1, C)),        # norm1 g/b
            _full_spec((C, 2 * C)), _full_spec((C, 2 * C)),  # mlp_w1 split
            _full_spec((2 * C, C)),                          # mlp_w2
            _full_spec((1, C)), _full_spec((1, C)),        # norm2 g/b
        ],
        out_specs=pl.BlockSpec((1, L, C), lambda b: (b, 0, 0)),
        compiler_params=pltpu.CompilerParams(
            dimension_semantics=("parallel",),
            vmem_limit_bytes=VMEM_LIMIT),
    )(x_stack.astype(jnp.float32), src_stack.astype(jnp.float32),
      wp["q_w"], wp["k_w"], wp["v_w"], wp["merge_w"],
      wp["norm1_g"], wp["norm1_b"],
      wp["mlp_w1_x"], wp["mlp_w1_m"], wp["mlp_w2"],
      wp["norm2_g"], wp["norm2_b"])


# ----------------------------------------------------------------------------
# Dual-softmax coarse matching
# ----------------------------------------------------------------------------
def _dual_softmax_kernel(f0_ref, f1_ref, o_ref, *, inv_temp_over_c, l0, l1):
    f0 = f0_ref[...]    # (L0p, Cp) bf16
    f1 = f1_ref[...]    # (L1p, Cp) bf16
    sim = lax.dot_general(f0, f1, (((1,), (1,)), ((), ())),
                          preferred_element_type=jnp.float32) * inv_temp_over_c
    L0p, L1p = sim.shape
    row_ids = lax.broadcasted_iota(jnp.int32, (L0p, L1p), 0)
    col_ids = lax.broadcasted_iota(jnp.int32, (L0p, L1p), 1)
    valid = (row_ids < l0) & (col_ids < l1)
    sim = jnp.where(valid, sim, jnp.float32(-1e30))

    # softmax over axis 0 (torch dim=1) and axis 1 (torch dim=2); keep only
    # sim / e0 / e1 live.
    m0 = jnp.max(sim, axis=0, keepdims=True)
    e0 = jnp.exp(sim - m0)
    s0 = jnp.sum(e0, axis=0, keepdims=True)
    m1 = jnp.max(sim, axis=1, keepdims=True)
    e1 = jnp.exp(sim - m1)
    s1 = jnp.sum(e1, axis=1, keepdims=True)

    conf = (e0 * pl.reciprocal(s0, approx=True)) * \
           (e1 * pl.reciprocal(s1, approx=True))
    o_ref[...] = jnp.where(valid, conf, 0.0)


def pallas_dual_softmax(f0, f1, temperature=0.1):
    """LoFTR CoarseMatching dual-softmax confidence matrix. f0:(L0,C), f1:(L1,C)."""
    L0, C = f0.shape
    L1, _ = f1.shape
    L0p = _round_up(L0, 8)
    L1p = _round_up(L1, 128)
    Cp = _round_up(C, 128)
    f0p = jnp.pad(f0.astype(jnp.bfloat16), ((0, L0p - L0), (0, Cp - C)))
    f1p = jnp.pad(f1.astype(jnp.bfloat16), ((0, L1p - L1), (0, Cp - C)))

    # TODO(synk): for production-size L0/L1 a two-pass tiled variant (column
    # stats pass + normalize pass) is needed; single VMEM block is fine here.
    kernel = functools.partial(_dual_softmax_kernel,
                               inv_temp_over_c=1.0 / (temperature * C),
                               l0=L0, l1=L1)
    out = pl.pallas_call(
        kernel,
        out_shape=jax.ShapeDtypeStruct((L0p, L1p), jnp.float32),
        grid=(1,),
        in_specs=[pl.BlockSpec((L0p, Cp), lambda i: (0, 0)),
                  pl.BlockSpec((L1p, Cp), lambda i: (0, 0))],
        out_specs=pl.BlockSpec((L0p, L1p), lambda i: (0, 0)),
        compiler_params=pltpu.CompilerParams(
            dimension_semantics=("arbitrary",),
            vmem_limit_bytes=VMEM_LIMIT),
    )(f0p, f1p)
    return out[:L0, :L1]


# ----------------------------------------------------------------------------
# Backbone: 3D conv via im2col (glue) + tiled Pallas matmul (compute)
# ----------------------------------------------------------------------------
def conv3d(x, w, b, stride, pad, activation="none"):
    """x: (N,H,W,D,Cin); w: (k,k,k,Cin,Cout); b: (Cout,). Returns (N,Ho,Wo,Do,Cout)."""
    N, H, W, D, Cin = x.shape
    k = w.shape[0]
    Cout = w.shape[-1]
    xp = jnp.pad(x, ((0, 0), (pad, pad), (pad, pad), (pad, pad), (0, 0)))
    Ho = (H + 2 * pad - k) // stride + 1
    Wo = (W + 2 * pad - k) // stride + 1
    Do = (D + 2 * pad - k) // stride + 1
    # TODO(synk): im2col materializes k^3 x the output-sized patches in HBM; a
    # tap-accumulation grid would avoid it, but strided windows are not
    # expressible via BlockSpec index_maps. The matmul below at least streams
    # the patch matrix through VMEM in M tiles with the weight tile resident.
    cols = []
    for kh in range(k):
        for kw in range(k):
            for kd in range(k):
                cols.append(
                    xp[:, kh:kh + Ho * stride:stride,
                          kw:kw + Wo * stride:stride,
                          kd:kd + Do * stride:stride, :]
                )
    patches = jnp.concatenate(cols, axis=-1)          # (N,Ho,Wo,Do, k^3*Cin)
    a = patches.reshape(N * Ho * Wo * Do, k * k * k * Cin)
    wm = w.reshape(k * k * k * Cin, Cout)
    out = pallas_matmul(a, wm, bias=b, activation=activation)
    return out.reshape(N, Ho, Wo, Do, Cout)


def backbone(x, p):
    # ResNetFPN-style coarse branch (simplified): stride-2 stem + 3x3x3 conv.
    h = conv3d(x, p["conv1_w"], p["conv1_b"], stride=2, pad=1, activation="relu")
    h = conv3d(h, p["conv2_w"], p["conv2_b"], stride=1, pad=1, activation="none")
    return h


# ----------------------------------------------------------------------------
# Positional encoding (sine, 3D)
# ----------------------------------------------------------------------------
def make_pos_encoding(C, H, W, D):
    # TODO(synk): exact PositionEncodingSine-3D channel interleave not given in
    # the snippet; sin/cos per-axis grouping approximated here.
    n = max(C // 6, 1)
    div = jnp.exp(-math.log(10000.0) * jnp.arange(n, dtype=jnp.float32) / n)
    hh, ww, dd = jnp.meshgrid(
        jnp.arange(H, dtype=jnp.float32),
        jnp.arange(W, dtype=jnp.float32),
        jnp.arange(D, dtype=jnp.float32),
        indexing="ij",
    )
    parts = []
    for g in (hh, ww, dd):
        ang = g[..., None] * div
        parts.append(jnp.sin(ang))
        parts.append(jnp.cos(ang))
    pe = jnp.concatenate(parts, axis=-1)
    if pe.shape[-1] < C:
        pe = jnp.concatenate(
            [pe, jnp.zeros((H, W, D, C - pe.shape[-1]), jnp.float32)], axis=-1
        )
    return pe[..., :C]


# ----------------------------------------------------------------------------
# LocalFeatureTransformer
# ----------------------------------------------------------------------------
def local_feature_transformer(f0, f1, tp, nhead):
    # f0, f1: (1, L, C)
    for layer_p, name in zip(tp["layers"], tp["layer_names"]):
        if name == "self":
            if f0.shape == f1.shape:
                # Batch both feature sets on a parallel grid axis (megacore).
                stacked = jnp.concatenate([f0, f1], axis=0)       # (2, L, C)
                out = encoder_layer_pallas(stacked, stacked, layer_p, nhead)
                f0, f1 = out[0:1], out[1:2]
            else:
                f0 = encoder_layer_pallas(f0, f0, layer_p, nhead)
                f1 = encoder_layer_pallas(f1, f1, layer_p, nhead)
        else:  # cross (sequential update, as in LoFTR source)
            f0 = encoder_layer_pallas(f0, f1, layer_p, nhead)
            f1 = encoder_layer_pallas(f1, f0, layer_p, nhead)
    return f0, f1


# ----------------------------------------------------------------------------
# Full forward pass
# ----------------------------------------------------------------------------
NHEAD = 4
FINAL_DIMS = 32
TEMPERATURE = 0.1


def lofmr_forward(params, data):
    # concat image + seg along channel (channels-last)
    in0 = jnp.concatenate([data["image0"], data["seg0"]], axis=-1)
    in1 = jnp.concatenate([data["image1"], data["seg1"]], axis=-1)

    feats_c0 = backbone(in0, params["backbone_0"])        # (N, Hc, Wc, Dc, C)
    feats_c1 = backbone(in1, params["backbone_1"])

    N, Hc, Wc, Dc, C = feats_c0.shape
    pe = make_pos_encoding(C, Hc, Wc, Dc)
    feats_c0 = feats_c0 + pe[None]
    feats_c1 = feats_c1 + pe[None]

    feat_c0 = feats_c0.reshape(N, Hc * Wc * Dc, C)        # 'n c h w d -> n (h w d) c'
    feat_c1 = feats_c1.reshape(N, Hc * Wc * Dc, C)

    ids0 = data["mask0_ids"]                              # (P0,) same ids every batch
    ids1 = data["gt_ids1"]                                # (P1,)
    p0 = jnp.concatenate([jnp.take(feat_c0[b], ids0, axis=0) for b in range(N)], axis=0)
    p1 = jnp.concatenate([jnp.take(feat_c1[b], ids1, axis=0) for b in range(N)], axis=0)
    b_ids = jnp.concatenate(
        [jnp.full((ids0.shape[0],), b, jnp.int32) for b in range(N)]
    )
    point0, point1 = p0[None], p1[None]                   # (1, N*P, C)

    point0, point1 = local_feature_transformer(
        point0, point1, params["transformer"], NHEAD)

    # CoarseMatching: dual-softmax confidence matrix (hot path in Pallas).
    # TODO(synk): threshold + mutual-NN match extraction produces dynamic
    # shapes; left to the host side, kernel returns the full confidence matrix.
    conf_matrix = pallas_dual_softmax(point0[0], point1[0], temperature=TEMPERATURE)

    return {
        "feat0": point0,
        "feat1": point1,
        "conf_matrix": conf_matrix[None],
        "b_ids": b_ids,
        "hwd0_c": (Hc, Wc, Dc),
        "hwd1_c": (Hc, Wc, Dc),
    }


# ----------------------------------------------------------------------------
# Deterministic parameter construction
# ----------------------------------------------------------------------------
def _init_linear(key, fan_in, fan_out):
    return jax.random.normal(key, (fan_in, fan_out), jnp.float32) / math.sqrt(fan_in)


def init_params(key, c_in=2, c_mid=16, c_out=FINAL_DIMS):
    keys = jax.random.split(key, 32)
    ki = iter(keys)

    def backbone_params():
        return {
            "conv1_w": jax.random.normal(next(ki), (3, 3, 3, c_in, c_mid), jnp.float32)
            / math.sqrt(27 * c_in),
            "conv1_b": jnp.zeros((c_mid,), jnp.float32),
            "conv2_w": jax.random.normal(next(ki), (3, 3, 3, c_mid, c_out), jnp.float32)
            / math.sqrt(27 * c_mid),
            "conv2_b": jnp.zeros((c_out,), jnp.float32),
        }

    def encoder_params():
        d = c_out
        dh = d // NHEAD
        qw = _init_linear(next(ki), d, d)
        kw = _init_linear(next(ki), d, d)
        vw = _init_linear(next(ki), d, d)
        mw = _init_linear(next(ki), d, d)
        w1 = _init_linear(next(ki), 2 * d, 2 * d)
        w2 = _init_linear(next(ki), 2 * d, d)
        # Pre-slice per-head weights (head h uses out-cols / in-rows h*dh:(h+1)*dh),
        # cast once to bf16 for the MXU inside the fused encoder kernel.
        return {
            "q_w": qw.reshape(d, NHEAD, dh).transpose(1, 0, 2).astype(jnp.bfloat16),
            "k_w": kw.reshape(d, NHEAD, dh).transpose(1, 0, 2).astype(jnp.bfloat16),
            "v_w": vw.reshape(d, NHEAD, dh).transpose(1, 0, 2).astype(jnp.bfloat16),
            "merge_w": mw.reshape(NHEAD, dh, d).astype(jnp.bfloat16),
            "norm1_g": jnp.ones((1, d), jnp.float32),
            "norm1_b": jnp.zeros((1, d), jnp.float32),
            "mlp_w1_x": w1[:d].astype(jnp.bfloat16),
            "mlp_w1_m": w1[d:].astype(jnp.bfloat16),
            "mlp_w2": w2.astype(jnp.bfloat16),
            "norm2_g": jnp.ones((1, d), jnp.float32),
            "norm2_b": jnp.zeros((1, d), jnp.float32),
        }

    return {
        "backbone_0": backbone_params(),
        "backbone_1": backbone_params(),
        "transformer": {
            "layer_names": ("self", "cross"),
            "layers": (encoder_params(), encoder_params()),
        },
    }


# ----------------------------------------------------------------------------
# Main
# ----------------------------------------------------------------------------
if __name__ == "__main__":
    key = jax.random.PRNGKey(0)
    k_img0, k_img1, k_seg0, k_seg1, k_ids0, k_ids1, k_params = jax.random.split(key, 7)

    N, H, W, D = 2, 8, 8, 8
    P0 = P1 = 8
    L_coarse = (H // 2) * (W // 2) * (D // 2)  # 64 coarse tokens

    data = {
        "image0": jax.random.normal(k_img0, (N, H, W, D, 1), jnp.float32),
        "image1": jax.random.normal(k_img1, (N, H, W, D, 1), jnp.float32),
        "seg0": jax.random.normal(k_seg0, (N, H, W, D, 1), jnp.float32),
        "seg1": jax.random.normal(k_seg1, (N, H, W, D, 1), jnp.float32),
        "mask0_ids": jax.random.randint(k_ids0, (P0,), 0, L_coarse),
        "gt_ids1": jax.random.randint(k_ids1, (P1,), 0, L_coarse),
    }

    params = init_params(k_params)

    out = lofmr_forward(params, data)
    jax.block_until_ready(out["conf_matrix"])
    jax.block_until_ready(out["feat0"])

    assert out["feat0"].shape == (1, N * P0, FINAL_DIMS)
    assert out["feat1"].shape == (1, N * P1, FINAL_DIMS)
    assert out["conf_matrix"].shape == (1, N * P0, N * P1)
    assert out["b_ids"].dtype == jnp.int32
    assert bool(jnp.all(jnp.isfinite(out["conf_matrix"])))
    assert bool(jnp.all(jnp.isfinite(out["feat0"])))

    print("KERNEL_OK")
</pallas_src>

<mosaic_0001>
module attributes {stable_mosaic.version = 11 : i64} {
  func.func @_matmul_kernel_bias(%arg0: i32, %arg1: i32, %arg2: i32, %arg3: memref<128x128xbf16, #tpu.memory_space<vmem>>, %arg4: memref<128x128xbf16, #tpu.memory_space<vmem>>, %arg5: memref<1x128xf32, #tpu.memory_space<vmem>>, %arg6: memref<128x128xf32, #tpu.memory_space<vmem>>, %arg7: memref<128x128xf32, #tpu.memory_space<vmem>>) attributes {dimension_semantics = [#tpu.dimension_semantics<parallel>, #tpu.dimension_semantics<parallel>, #tpu.dimension_semantics<arbitrary>], iteration_bounds = array<i64: 1, 1, 1>, scalar_prefetch = 0 : i64, scratch_operands = 1 : i64, tpu.core_type = #tpu.core_type<tc>, window_params = [{transform_indices = @transform_0, window_bounds = array<i64: 128, 128>}, {transform_indices = @transform_1, window_bounds = array<i64: 128, 128>}, {transform_indices = @transform_2, window_bounds = array<i64: 1, 128>}, {transform_indices = @transform_3, window_bounds = array<i64: 128, 128>}]} {
    %c0_i32 = arith.constant 0 : i32
    %0 = arith.cmpi eq, %arg2, %c0_i32 : i32
    %1 = arith.extui %0 : i1 to i32
    %c0_i32_0 = arith.constant 0 : i32
    %2 = arith.cmpi ne, %1, %c0_i32_0 : i32
    scf.if %2 {
      %cst_10 = arith.constant 0.000000e+00 : f32
      %12 = vector.broadcast %cst_10 : f32 to vector<128x128xf32>
      %c0_11 = arith.constant 0 : index
      %c0_12 = arith.constant 0 : index
      %13 = vector.load %arg7[%c0_11, %c0_12] : memref<128x128xf32, #tpu.memory_space<vmem>>, vector<128x128xf32>
      tpu.vector_store %arg7[%c0_11, %c0_12], %12 {strides = array<i32>} : memref<128x128xf32, #tpu.memory_space<vmem>>, vector<128x128xf32>,
    } else {
    }
    %c0 = arith.constant 0 : index
    %c0_1 = arith.constant 0 : index
    %3 = vector.load %arg7[%c0, %c0_1] : memref<128x128xf32, #tpu.memory_space<vmem>>, vector<128x128xf32>
    %c0_2 = arith.constant 0 : index
    %c0_3 = arith.constant 0 : index
    %4 = vector.load %arg3[%c0_2, %c0_3] : memref<128x128xbf16, #tpu.memory_space<vmem>>, vector<128x128xbf16>
    %c0_4 = arith.constant 0 : index
    %c0_5 = arith.constant 0 : index
    %5 = vector.load %arg4[%c0_4, %c0_5] : memref<128x128xbf16, #tpu.memory_space<vmem>>, vector<128x128xbf16>
    %cst = arith.constant dense<0.000000e+00> : vector<128x128xf32>
    %6 = tpu.matmul %4, %5, %cst {dimension_numbers = #tpu.dot_dimension_numbers<[1], [0], [0], [1], [0, 0, 1, 1], [], []>} : vector<128x128xbf16>, vector<128x128xbf16>, vector<128x128xf32> -> vector<128x128xf32>
    %7 = arith.addf %3, %6 : vector<128x128xf32>
    %c0_6 = arith.constant 0 : index
    %c0_7 = arith.constant 0 : index
    %8 = vector.load %arg7[%c0_6, %c0_7] : memref<128x128xf32, #tpu.memory_space<vmem>>, vector<128x128xf32>
    tpu.vector_store %arg7[%c0_6, %c0_7], %7 {strides = array<i32>} : memref<128x128xf32, #tpu.memory_space<vmem>>, vector<128x128xf32>,
    %c0_i32_8 = arith.constant 0 : i32
    %9 = arith.cmpi eq, %arg2, %c0_i32_8 : i32
    %10 = arith.extui %9 : i1 to i32
    %c0_i32_9 = arith.constant 0 : i32
    %11 = arith.cmpi ne, %10, %c0_i32_9 : i32
    scf.if %11 {
      %c0_10 = arith.constant 0 : index
      %c0_11 = arith.constant 0 : index
      %12 = vector.load %arg7[%c0_10, %c0_11] : memref<128x128xf32, #tpu.memory_space<vmem>>, vector<128x128xf32>
      %c0_12 = arith.constant 0 : index
      %c0_13 = arith.constant 0 : index
      %13 = vector.load %arg5[%c0_12, %c0_13] : memref<1x128xf32, #tpu.memory_space<vmem>>, vector<1x128xf32>
      %14 = vector.broadcast %13 : vector<1x128xf32> to vector<128x128xf32>
      %15 = arith.addf %12, %14 : vector<128x128xf32>
      %cst_14 = arith.constant 0.000000e+00 : f32
      %16 = vector.broadcast %cst_14 : f32 to vector<128x128xf32>
      %17 = arith.maximumf %15, %16 : vector<128x128xf32>
      %c0_15 = arith.constant 0 : index
      %c0_16 = arith.constant 0 : index
      %18 = vector.load %arg6[%c0_15, %c0_16] : memref<128x128xf32, #tpu.memory_space<vmem>>, vector<128x128xf32>
      tpu.vector_store %arg6[%c0_15, %c0_16], %17 {strides = array<i32>} : memref<128x128xf32, #tpu.memory_space<vmem>>, vector<128x128xf32>,
    } else {
    }
    return
  }
  func.func @transform_0(%arg0: i32, %arg1: i32, %arg2: i32) -> (i32, i32) {
    %c0_i32 = arith.constant 0 : i32
    return %arg0, %arg2 : i32, i32
  }
  func.func @transform_1(%arg0: i32, %arg1: i32, %arg2: i32) -> (i32, i32) {
    %c0_i32 = arith.constant 0 : i32
    return %arg2, %arg1 : i32, i32
  }
  func.func @transform_2(%arg0: i32, %arg1: i32, %arg2: i32) -> (i32, i32) {
    %c0_i32 = arith.constant 0 : i32
    %c0_i32_0 = arith.constant 0 : i32
    return %c0_i32, %arg1 : i32, i32
  }
  func.func @transform_3(%arg0: i32, %arg1: i32, %arg2: i32) -> (i32, i32) {
    %c0_i32 = arith.constant 0 : i32
    return %arg0, %arg1 : i32, i32
  }
}

</mosaic_0001>

<llo_original>
// kernel: tpu_custom_call.1
$region0: #{tpu_custom_call.1}
  #allocation0 [shape = 'u32[]', space=smem, size = 0x4, offset = 0x4, fixed_abs, tag = 'smem constant byte address 0x4 - core index']
  #allocation1 [shape = 'u32[144,128]{1,0:T(1,128)}', space=vmem, size = 0x12000, scoped, tag = 'internal scratch']
  #allocation2 [shape = 'f32[128,128]{1,0:T(8,128)}', space=vmem, size = 0x10000, scoped, tag = 'scratch operand']
  %s0 = inlined_call_operand.hbm [shape: bf16[128,128], index: 0, kind: input, shape index: {}]
  %s1 = inlined_call_operand.hbm [shape: bf16[128,128], index: 1, kind: input, shape index: {}]
  %s2 = inlined_call_operand.hbm [shape: f32[1,128], index: 2, kind: input, shape index: {}]
  %s3 = inlined_call_operand.hbm [shape: f32[128,128], index: 3, kind: output, shape index: {}]
  %s4 = sld [smem:[#allocation0]]
  $region42: #{tpu_custom_call.1} parent=0
    _
  %s6 = ssub.s32 1, %s4
  %s7 = scalar_select 0, %s6, %s4
  $region1: #{tpu_custom_call.1} parent=0
    #allocation3 [shape = 'u8[32768]{0}', space=vmem, size = 0x8000, scoped, tag = 'input window, operand 0, single buffered']
    #allocation4 [shape = 's32[1]{0}', space=sflag, size = 0x4, scoped, tag = 'scoped memory for tpu_custom_call.1']
    #allocation5 [shape = 's32[1]{0}', space=sflag, size = 0x4, scoped, tag = 'scoped memory for tpu_custom_call.1']
    #allocation6 [shape = 'u8[32768]{0}', space=vmem, size = 0x8000, scoped, tag = 'input window, operand 1, single buffered']
    #allocation7 [shape = 's32[1]{0}', space=sflag, size = 0x4, scoped, tag = 'scoped memory for tpu_custom_call.1']
    #allocation8 [shape = 'u8[512]{0}', space=vmem, size = 0x400, scoped, tag = 'input window, operand 2, single buffered']
    #allocation9 [shape = 'u8[65536]{0}', space=vmem, size = 0x10000, scoped, tag = 'output window, operand 0, single buffered']
    %8 = vsyncpa [#allocation4], 0
    %9 = vsyncpa [#allocation7], 0
    %10 = vsyncpa [#allocation5], 0
    // Predicated region
    $region2: #{tpu_custom_call.1} parent=1 // pred_check
      _
    $region3: #{tpu_custom_call.1} parent=1 // pred_check_branch
      %12 = sbr.rel (0) target = $region5
    $region4: #{tpu_custom_call.1} parent=1 // pred_region
      %s14 = ssub.s32 1024, 1024
      %15 = vsyncadd [#allocation4], %s14
      %s16 = sshll.u32 [#allocation3], 4
      %s17 = int_to_ptr.vmem [resolvable:$true] %s16
      %22 = dma.hbm_to_vmem [thread:$0]  %s0, 1024, %s17, [#allocation4], 64, 64, 4
    $region5: #{tpu_custom_call.1} parent=1 // pred_fallthru
      _
    // Predicated region
    $region6: #{tpu_custom_call.1} parent=1 // pred_check
      _
    $region7: #{tpu_custom_call.1} parent=1 // pred_check_branch
      %24 = sbr.rel (0) target = $region9
    $region8: #{tpu_custom_call.1} parent=1 // pred_region
      %s26 = ssub.s32 1024, 1024
      %27 = vsyncadd [#allocation7], %s26
      %s28 = sshll.u32 [#allocation6], 4
      %s29 = int_to_ptr.vmem [resolvable:$true] %s28
      %34 = dma.hbm_to_vmem [thread:$0]  %s1, 1024, %s29, [#allocation7], 64, 64, 4
    $region9: #{tpu_custom_call.1} parent=1 // pred_fallthru
      _
    // Predicated region
    $region10: #{tpu_custom_call.1} parent=1 // pred_check
      _
    $region11: #{tpu_custom_call.1} parent=1 // pred_check_branch
      %36 = sbr.rel (0) target = $region13
    $region12: #{tpu_custom_call.1} parent=1 // pred_region
      %s38 = ssub.s32 16, 16
      %39 = vsyncadd [#allocation7], %s38
      %s41 = sshll.u32 [#allocation8], 4
      %s42 = int_to_ptr.vmem [resolvable:$true] %s41
      %44 = dma.hbm_to_vmem [thread:$0]  %s2, 16, %s42, [#allocation7]
    $region13: #{tpu_custom_call.1} parent=1 // pred_fallthru
      _
    // Predicated region
    $region14: #{tpu_custom_call.1} parent=1 // pred_check
      _
    $region15: #{tpu_custom_call.1} parent=1 // pred_check_branch
      %46 = sbr.rel (0) target = $region17
    $region16: #{tpu_custom_call.1} parent=1 // pred_region
      %47 = dma.done [#allocation4], 1024
    $region17: #{tpu_custom_call.1} parent=1 // pred_fallthru
      _
    // Predicated region
    $region18: #{tpu_custom_call.1} parent=1 // pred_check
      _
    $region19: #{tpu_custom_call.1} parent=1 // pred_check_branch
      %49 = sbr.rel (0) target = $region21
    $region20: #{tpu_custom_call.1} parent=1 // pred_region
      %50 = dma.done [#allocation7], 1024
    $region21: #{tpu_custom_call.1} parent=1 // pred_fallthru
      _
    // Predicated region
    $region22: #{tpu_custom_call.1} parent=1 // pred_check
      _
    $region23: #{tpu_custom_call.1} parent=1 // pred_check_branch
      %52 = sbr.rel (0) target = $region25
    $region24: #{tpu_custom_call.1} parent=1 // pred_region
      %53 = dma.done [#allocation7], 16
    $region25: #{tpu_custom_call.1} parent=1 // pred_fallthru
      _
    %p55 = scmp.eq.s32.totalorder 0, 0
    // Predicated region
    $region26: #{tpu_custom_call.1} parent=1 // pred_check
      %p56 = pneg %p55
    $region27: #{tpu_custom_call.1} parent=1 // pred_check_branch
      %58 = sbr.rel (%p56) target = $region29
    $region28: #{tpu_custom_call.1} parent=1 // pred_region
      %59 = vst [vmem:[#allocation2] sm:$0xff] 0.0
      %60 = vst [vmem:[#allocation2 + $0x8] sm:$0xff] 0.0
      %61 = vst [vmem:[#allocation2 + $0x10] sm:$0xff] 0.0
      %62 = vst [vmem:[#allocation2 + $0x18] sm:$0xff] 0.0
      %63 = vst [vmem:[#allocation2 + $0x20] sm:$0xff] 0.0
      %64 = vst [vmem:[#allocation2 + $0x28] sm:$0xff] 0.0
      %65 = vst [vmem:[#allocation2 + $0x30] sm:$0xff] 0.0
      %66 = vst [vmem:[#allocation2 + $0x38] sm:$0xff] 0.0
      %67 = vst [vmem:[#allocation2 + $0x40] sm:$0xff] 0.0
      %68 = vst [vmem:[#allocation2 + $0x48] sm:$0xff] 0.0
      %69 = vst [vmem:[#allocation2 + $0x50] sm:$0xff] 0.0
      %70 = vst [vmem:[#allocation2 + $0x58] sm:$0xff] 0.0
      %71 = vst [vmem:[#allocation2 + $0x60] sm:$0xff] 0.0
      %72 = vst [vmem:[#allocation2 + $0x68] sm:$0xff] 0.0
      %73 = vst [vmem:[#allocation2 + $0x70] sm:$0xff] 0.0
      %74 = vst [vmem:[#allocation2 + $0x78] sm:$0xff] 0.0
    $region29: #{tpu_custom_call.1} parent=1 // pred_fallthru
      _
    %v75 = vld [vmem:[#allocation2] sm:$0xff]
    %v76 = vld [vmem:[#allocation2 + $0x8] sm:$0xff]
    %v77 = vld [vmem:[#allocation2 + $0x10] sm:$0xff]
    %v78 = vld [vmem:[#allocation2 + $0x18] sm:$0xff]
    %v79 = vld [vmem:[#allocation2 + $0x20] sm:$0xff]
    %v80 = vld [vmem:[#allocation2 + $0x28] sm:$0xff]
    %v81 = vld [vmem:[#allocation2 + $0x30] sm:$0xff]
    %v82 = vld [vmem:[#allocation2 + $0x38] sm:$0xff]
    %v83 = vld [vmem:[#allocation2 + $0x40] sm:$0xff]
    %v84 = vld [vmem:[#allocation2 + $0x48] sm:$0xff]
    %v85 = vld [vmem:[#allocation2 + $0x50] sm:$0xff]
    %v86 = vld [vmem:[#allocation2 + $0x58] sm:$0xff]
    %v87 = vld [vmem:[#allocation2 + $0x60] sm:$0xff]
    %v88 = vld [vmem:[#allocation2 + $0x68] sm:$0xff]
    %v89 = vld [vmem:[#allocation2 + $0x70] sm:$0xff]
    %v90 = vld [vmem:[#allocation2 + $0x78] sm:$0xff]
    %v91 = vld [vmem:[#allocation3] sm:$0xf]
    %v92 = vld [vmem:[#allocation3 + $0x4] sm:$0xf]
    %v93 = vld [vmem:[#allocation3 + $0x8] sm:$0xf]
    %v94 = vld [vmem:[#allocation3 + $0xc] sm:$0xf]
    %v95 = vld [vmem:[#allocation3 + $0x10] sm:$0xf]
    %v96 = vld [vmem:[#allocation3 + $0x14] sm:$0xf]
    %v97 = vld [vmem:[#allocation3 + $0x18] sm:$0xf]
    %v98 = vld [vmem:[#allocation3 + $0x1c] sm:$0xf]
    %v99 = vld [vmem:[#allocation3 + $0x20] sm:$0xf]
    %v100 = vld [vmem:[#allocation3 + $0x24] sm:$0xf]
    %v101 = vld [vmem:[#allocation3 + $0x28] sm:$0xf]
    %v102 = vld [vmem:[#allocation3 + $0x2c] sm:$0xf]
    %v103 = vld [vmem:[#allocation3 + $0x30] sm:$0xf]
    %v104 = vld [vmem:[#allocation3 + $0x34] sm:$0xf]
    %v105 = vld [vmem:[#allocation3 + $0x38] sm:$0xf]
    %v106 = vld [vmem:[#allocation3 + $0x3c] sm:$0xf]
    %v107 = vld [vmem:[#allocation6] sm:$0xf]
    %v108 = vld [vmem:[#allocation6 + $0x4] sm:$0xf]
    %v109 = vld [vmem:[#allocation6 + $0x8] sm:$0xf]
    %v110 = vld [vmem:[#allocation6 + $0xc] sm:$0xf]
    %v111 = vld [vmem:[#allocation6 + $0x10] sm:$0xf]
    %v112 = vld [vmem:[#allocation6 + $0x14] sm:$0xf]
    %v113 = vld [vmem:[#allocation6 + $0x18] sm:$0xf]
    %v114 = vld [vmem:[#allocation6 + $0x1c] sm:$0xf]
    %v115 = vld [vmem:[#allocation6 + $0x20] sm:$0xf]
    %v116 = vld [vmem:[#allocation6 + $0x24] sm:$0xf]
    %v117 = vld [vmem:[#allocation6 + $0x28] sm:$0xf]
    %v118 = vld [vmem:[#allocation6 + $0x2c] sm:$0xf]
    %v119 = vld [vmem:[#allocation6 + $0x30] sm:$0xf]
    %v120 = vld [vmem:[#allocation6 + $0x34] sm:$0xf]
    %v121 = vld [vmem:[#allocation6 + $0x38] sm:$0xf]
    %v122 = vld [vmem:[#allocation6 + $0x3c] sm:$0xf]
    %v139 = vunpack.c.l.b16 %v91
    %v140 = vunpack.c.l.b16 %v92
    %v141 = vunpack.c.l.b16 %v93
    %v142 = vunpack.c.l.b16 %v94
    %v143 = vunpack.c.l.b16 %v95
    %v144 = vunpack.c.l.b16 %v96
    %v145 = vunpack.c.l.b16 %v97
    %v146 = vunpack.c.l.b16 %v98
    %v147 = vunpack.c.l.b16 %v99
    %v148 = vunpack.c.l.b16 %v100
    %v149 = vunpack.c.l.b16 %v101
    %v150 = vunpack.c.l.b16 %v102
    %v151 = vunpack.c.l.b16 %v103
    %v152 = vunpack.c.l.b16 %v104
    %v153 = vunpack.c.l.b16 %v105
    %v154 = vunpack.c.l.b16 %v106
    %v155 = vpack.c.b16 %v140, %v139
    %v156 = vpack.c.b16 %v142, %v141
    %v157 = vpack.c.b16 %v144, %v143
    %v158 = vpack.c.b16 %v146, %v145
    %v159 = vpack.c.b16 %v148, %v147
    %v160 = vpack.c.b16 %v150, %v149
    %v161 = vpack.c.b16 %v152, %v151
    %v162 = vpack.c.b16 %v154, %v153
    %v187 = vunpack.c.l.b16 %v107
    %v188 = vunpack.c.l.b16 %v108
    %v189 = vunpack.c.l.b16 %v109
    %v190 = vunpack.c.l.b16 %v110
    %v191 = vunpack.c.l.b16 %v111
    %v192 = vunpack.c.l.b16 %v112
    %v193 = vunpack.c.l.b16 %v113
    %v194 = vunpack.c.l.b16 %v114
    %v195 = vunpack.c.l.b16 %v115
    %v196 = vunpack.c.l.b16 %v116
    %v197 = vunpack.c.l.b16 %v117
    %v198 = vunpack.c.l.b16 %v118
    %v199 = vunpack.c.l.b16 %v119
    %v200 = vunpack.c.l.b16 %v120
    %v201 = vunpack.c.l.b16 %v121
    %v202 = vunpack.c.l.b16 %v122
    %v203 = vpack.c.b16 %v188, %v187
    %v204 = vpack.c.b16 %v190, %v189
    %v205 = vpack.c.b16 %v192, %v191
    %v206 = vpack.c.b16 %v194, %v193
    %v207 = vpack.c.b16 %v196, %v195
    %v208 = vpack.c.b16 %v198, %v197
    %v209 = vpack.c.b16 %v200, %v199
    %v210 = vpack.c.b16 %v202, %v201
    %219 = vmatprep.subr.bf16.mxu0 0
    %220 = vmatpush1.bf16.msra.mxu0 %v203
    %221 = vmatprep.subr.bf16.mxu0 0
    %222 = vmatpush1.bf16.msra.mxu0 %v204
    %223 = vmatprep.subr.bf16.mxu0 0
    %224 = vmatpush1.bf16.msra.mxu0 %v205
    %225 = vmatprep.subr.bf16.mxu0 0
    %226 = vmatpush1.bf16.msra.mxu0 %v206
    %227 = vmatprep.subr.bf16.mxu0 0
    %228 = vmatpush1.bf16.msra.mxu0 %v207
    %229 = vmatprep.subr.bf16.mxu0 0
    %230 = vmatpush1.bf16.msra.mxu0 %v208
    %231 = vmatprep.subr.bf16.mxu0 0
    %232 = vmatpush1.bf16.msra.mxu0 %v209
    %233 = vmatprep.subr.bf16.mxu0 0
    %234 = vmatpush1.bf16.msra.mxu0 %v210
    %235 = vmatprep.subr.bf16.mxu0 0
    %236 = vmatpush1.bf16.msra.mxu0 0
    %237 = vmatprep.subr.bf16.mxu0 0
    %238 = vmatpush1.bf16.msra.mxu0 0
    %239 = vmatprep.subr.bf16.mxu0 0
    %240 = vmatpush1.bf16.msra.mxu0 0
    %241 = vmatprep.subr.bf16.mxu0 0
    %242 = vmatpush1.bf16.msra.mxu0 0
    %243 = vmatprep.subr.bf16.mxu0 0
    %244 = vmatpush1.bf16.msra.mxu0 0
    %245 = vmatprep.subr.bf16.mxu0 0
    %246 = vmatpush1.bf16.msra.mxu0 0
    %247 = vmatprep.subr.bf16.mxu0 0
    %248 = vmatpush1.bf16.msra.mxu0 0
    %249 = vmatprep.subr.bf16.mxu0 0
    %250 = vmatpush1.bf16.msra.mxu0 0
    %251 = vmatprep.mubr.bf16.mxu0 0
    %252 = vmatmul.mubr.bf16.gmra.mrb[0].mxu0 %v155
    %v253 = vpop.f32.mrb[0].mxu0
    %v254 = vadd.f32 0.0, %v253
    %v255 = vpop.f32.mrb[0].mxu0
    %v256 = vpop.f32.mrb[0].mxu0
    %v257 = vadd.f32 0.0, %v256
    %v258 = vpop.f32.mrb[0].mxu0
    %259 = vmatprep.mubr.bf16.mxu0 0
    %260 = vmatmul.mubr.bf16.gmra.mrb[0].mxu0 %v156
    %v261 = vpop.f32.mrb[0].mxu0
    %v262 = vadd.f32 0.0, %v261
    %v263 = vpop.f32.mrb[0].mxu0
    %v264 = vpop.f32.mrb[0].mxu0
    %v265 = vadd.f32 0.0, %v264
    %v266 = vpop.f32.mrb[0].mxu0
    %267 = vmatprep.mubr.bf16.mxu0 0
    %268 = vmatmul.mubr.bf16.gmra.mrb[0].mxu0 %v157
    %v269 = vpop.f32.mrb[0].mxu0
    %v270 = vadd.f32 0.0, %v269
    %v271 = vpop.f32.mrb[0].mxu0
    %v272 = vpop.f32.mrb[0].mxu0
    %v273 = vadd.f32 0.0, %v272
    %v274 = vpop.f32.mrb[0].mxu0
    %275 = vmatprep.mubr.bf16.mxu0 0
    %276 = vmatmul.mubr.bf16.gmra.mrb[0].mxu0 %v158
    %v277 = vpop.f32.mrb[0].mxu0
    %v278 = vadd.f32 0.0, %v277
    %v279 = vpop.f32.mrb[0].mxu0
    %v280 = vpop.f32.mrb[0].mxu0
    %v281 = vadd.f32 0.0, %v280
    %v282 = vpop.f32.mrb[0].mxu0
    %283 = vmatprep.mubr.bf16.mxu0 0
    %284 = vmatmul.mubr.bf16.gmra.mrb[0].mxu0 %v159
    %v285 = vpop.f32.mrb[0].mxu0
    %v286 = vadd.f32 0.0, %v285
    %v287 = vpop.f32.mrb[0].mxu0
    %v288 = vpop.f32.mrb[0].mxu0
    %v289 = vadd.f32 0.0, %v288
    %v290 = vpop.f32.mrb[0].mxu0
    %291 = vmatprep.mubr.bf16.mxu0 0
    %292 = vmatmul.mubr.bf16.gmra.mrb[0].mxu0 %v160
    %v293 = vpop.f32.mrb[0].mxu0
    %v294 = vadd.f32 0.0, %v293
    %v295 = vpop.f32.mrb[0].mxu0
    %v296 = vpop.f32.mrb[0].mxu0
    %v297 = vadd.f32 0.0, %v296
    %v298 = vpop.f32.mrb[0].mxu0
    %299 = vmatprep.mubr.bf16.mxu0 0
    %300 = vmatmul.mubr.bf16.gmra.mrb[0].mxu0 %v161
    %v301 = vpop.f32.mrb[0].mxu0
    %v302 = vadd.f32 0.0, %v301
    %v303 = vpop.f32.mrb[0].mxu0
    %v304 = vpop.f32.mrb[0].mxu0
    %v305 = vadd.f32 0.0, %v304
    %v306 = vpop.f32.mrb[0].mxu0
    %307 = vmatprep.mubr.bf16.mxu0 0
    %308 = vmatmul.mubr.bf16.gmra.mrb[0].mxu0 %v162
    %v309 = vpop.f32.mrb[0].mxu0
    %v310 = vadd.f32 0.0, %v309
    %v311 = vpop.f32.mrb[0].mxu0
    %v312 = vpop.f32.mrb[0].mxu0
    %v313 = vadd.f32 0.0, %v312
    %v314 = vpop.f32.mrb[0].mxu0
    %315 = vdwg.mxu0
    %v316 = vadd.f32 %v75, %v254
    %v317 = vadd.f32 %v76, %v257
    %v318 = vadd.f32 %v77, %v262
    %v319 = vadd.f32 %v78, %v265
    %v320 = vadd.f32 %v79, %v270
    %v321 = vadd.f32 %v80, %v273
    %v322 = vadd.f32 %v81, %v278
    %v323 = vadd.f32 %v82, %v281
    %v324 = vadd.f32 %v83, %v286
    %v325 = vadd.f32 %v84, %v289
    %v326 = vadd.f32 %v85, %v294
    %v327 = vadd.f32 %v86, %v297
    %v328 = vadd.f32 %v87, %v302
    %v329 = vadd.f32 %v88, %v305
    %v330 = vadd.f32 %v89, %v310
    %v331 = vadd.f32 %v90, %v313
    %332 = vst [vmem:[#allocation2] sm:$0xff] %v316
    %333 = vst [vmem:[#allocation2 + $0x8] sm:$0xff] %v317
    %334 = vst [vmem:[#allocation2 + $0x10] sm:$0xff] %v318
    %335 = vst [vmem:[#allocation2 + $0x18] sm:$0xff] %v319
    %336 = vst [vmem:[#allocation2 + $0x20] sm:$0xff] %v320
    %337 = vst [vmem:[#allocation2 + $0x28] sm:$0xff] %v321
    %338 = vst [vmem:[#allocation2 + $0x30] sm:$0xff] %v322
    %339 = vst [vmem:[#allocation2 + $0x38] sm:$0xff] %v323
    %340 = vst [vmem:[#allocation2 + $0x40] sm:$0xff] %v324
    %341 = vst [vmem:[#allocation2 + $0x48] sm:$0xff] %v325
    %342 = vst [vmem:[#allocation2 + $0x50] sm:$0xff] %v326
    %343 = vst [vmem:[#allocation2 + $0x58] sm:$0xff] %v327
    %344 = vst [vmem:[#allocation2 + $0x60] sm:$0xff] %v328
    %345 = vst [vmem:[#allocation2 + $0x68] sm:$0xff] %v329
    %346 = vst [vmem:[#allocation2 + $0x70] sm:$0xff] %v330
    %347 = vst [vmem:[#allocation2 + $0x78] sm:$0xff] %v331
    // Predicated region
    $region30: #{tpu_custom_call.1} parent=1 // pred_check
      %p348 = pneg %p55
    $region31: #{tpu_custom_call.1} parent=1 // pred_check_branch
      %350 = sbr.rel (%p348) target = $region33
    $region32: #{tpu_custom_call.1} parent=1 // pred_region
      %v351 = vld [vmem:[#allocation2] sm:$0xff]
      %v352 = vld [vmem:[#allocation2 + $0x8] sm:$0xff]
      %v353 = vld [vmem:[#allocation2 + $0x10] sm:$0xff]
      %v354 = vld [vmem:[#allocation2 + $0x18] sm:$0xff]
      %v355 = vld [vmem:[#allocation2 + $0x20] sm:$0xff]
      %v356 = vld [vmem:[#allocation2 + $0x28] sm:$0xff]
      %v357 = vld [vmem:[#allocation2 + $0x30] sm:$0xff]
      %v358 = vld [vmem:[#allocation2 + $0x38] sm:$0xff]
      %v359 = vld [vmem:[#allocation2 + $0x40] sm:$0xff]
      %v360 = vld [vmem:[#allocation2 + $0x48] sm:$0xff]
      %v361 = vld [vmem:[#allocation2 + $0x50] sm:$0xff]
      %v362 = vld [vmem:[#allocation2 + $0x58] sm:$0xff]
      %v363 = vld [vmem:[#allocation2 + $0x60] sm:$0xff]
      %v364 = vld [vmem:[#allocation2 + $0x68] sm:$0xff]
      %v365 = vld [vmem:[#allocation2 + $0x70] sm:$0xff]
      %v366 = vld [vmem:[#allocation2 + $0x78] sm:$0xff]
      %v367 = vld [vmem:[#allocation8] sm:$0x1]
      %v369 = vlaneseq
      %v370 = vshrl.u32 %v369, 7
      %v371 = vsub.s32 0, %v370
      %v372 = vrot.slane %v367, %v371
      %v374 = vadd.f32 %v351, %v372
      %v375 = vadd.f32 %v352, %v372
      %v376 = vadd.f32 %v353, %v372
      %v377 = vadd.f32 %v354, %v372
      %v378 = vadd.f32 %v355, %v372
      %v379 = vadd.f32 %v356, %v372
      %v380 = vadd.f32 %v357, %v372
      %v381 = vadd.f32 %v358, %v372
      %v382 = vadd.f32 %v359, %v372
      %v383 = vadd.f32 %v360, %v372
      %v384 = vadd.f32 %v361, %v372
      %v385 = vadd.f32 %v362, %v372
      %v386 = vadd.f32 %v363, %v372
      %v387 = vadd.f32 %v364, %v372
      %v388 = vadd.f32 %v365, %v372
      %v389 = vadd.f32 %v366, %v372
      %v390 = vmax.f32 %v374, 0.0
      %v391 = vmax.f32 %v375, 0.0
      %v392 = vmax.f32 %v376, 0.0
      %v393 = vmax.f32 %v377, 0.0
      %v394 = vmax.f32 %v378, 0.0
      %v395 = vmax.f32 %v379, 0.0
      %v396 = vmax.f32 %v380, 0.0
      %v397 = vmax.f32 %v381, 0.0
      %v398 = vmax.f32 %v382, 0.0
      %v399 = vmax.f32 %v383, 0.0
      %v400 = vmax.f32 %v384, 0.0
      %v401 = vmax.f32 %v385, 0.0
      %v402 = vmax.f32 %v386, 0.0
      %v403 = vmax.f32 %v387, 0.0
      %v404 = vmax.f32 %v388, 0.0
      %v405 = vmax.f32 %v389, 0.0
      %406 = vst [vmem:[#allocation9] sm:$0xff] %v390
      %407 = vst [vmem:[#allocation9 + $0x8] sm:$0xff] %v391
      %408 = vst [vmem:[#allocation9 + $0x10] sm:$0xff] %v392
      %409 = vst [vmem:[#allocation9 + $0x18] sm:$0xff] %v393
      %410 = vst [vmem:[#allocation9 + $0x20] sm:$0xff] %v394
      %411 = vst [vmem:[#allocation9 + $0x28] sm:$0xff] %v395
      %412 = vst [vmem:[#allocation9 + $0x30] sm:$0xff] %v396
      %413 = vst [vmem:[#allocation9 + $0x38] sm:$0xff] %v397
      %414 = vst [vmem:[#allocation9 + $0x40] sm:$0xff] %v398
      %415 = vst [vmem:[#allocation9 + $0x48] sm:$0xff] %v399
      %416 = vst [vmem:[#allocation9 + $0x50] sm:$0xff] %v400
      %417 = vst [vmem:[#allocation9 + $0x58] sm:$0xff] %v401
      %418 = vst [vmem:[#allocation9 + $0x60] sm:$0xff] %v402
      %419 = vst [vmem:[#allocation9 + $0x68] sm:$0xff] %v403
      %420 = vst [vmem:[#allocation9 + $0x70] sm:$0xff] %v404
      %421 = vst [vmem:[#allocation9 + $0x78] sm:$0xff] %v405
    $region33: #{tpu_custom_call.1} parent=1 // pred_fallthru
      _
    // Predicated region
    $region34: #{tpu_custom_call.1} parent=1 // pred_check
      _
    $region35: #{tpu_custom_call.1} parent=1 // pred_check_branch
      %423 = sbr.rel (0) target = $region37
    $region36: #{tpu_custom_call.1} parent=1 // pred_region
      %s425 = ssub.s32 2048, 2048
      %426 = vsyncadd [#allocation5], %s425
      %s427 = sshll.u32 [#allocation9], 4
      %s428 = int_to_ptr.vmem [resolvable:$true] %s427
      %433 = dma.vmem_to_hbm [thread:$0]  %s428, 2048, %s3, [#allocation5], 128, 128, 8
    $region37: #{tpu_custom_call.1} parent=1 // pred_fallthru
      _
    // Predicated region
    $region38: #{tpu_custom_call.1} parent=1 // pred_check
      _
    $region39: #{tpu_custom_call.1} parent=1 // pred_check_branch
      %435 = sbr.rel (0) target = $region41
    $region40: #{tpu_custom_call.1} parent=1 // pred_region
      %436 = dma.done [#allocation5], 2048
    $region41: #{tpu_custom_call.1} parent=1 // pred_fallthru
      _
    %437 = vsyncpa [#allocation4], 1
    %438 = vsyncpa [#allocation7], 1
    %439 = vsyncpa [#allocation5], 1

</llo_original>
